<compile_context>
chip_gen: v5e
topology: v5e:2x2
jax: 0.10.0
libtpu: 0.0.40
codegen_flags: <defaults>
</compile_context>

<pallas_src>
import jax
import jax.numpy as jnp
from jax import lax
from jax.experimental import pallas as pl
from jax.experimental.pallas import tpu as pltpu

# Module constants (from tool4nlp/bert.py)
D_MODEL = 768
MAXLEN = 30
N_SEGMENTS = 2
VOCAB_SIZE = 4          # {'[PAD]', '[CLS]', '[SEP]', '[MASK]'}
LN_EPS = 1e-5           # torch.nn.LayerNorm default

POS_OFFSET = VOCAB_SIZE                  # 4
SEG_OFFSET = VOCAB_SIZE + MAXLEN         # 34
N_TOTAL = VOCAB_SIZE + MAXLEN + N_SEGMENTS   # 36


def _round_up(x, m):
    return ((x + m - 1) // m) * m


K_PAD = _round_up(N_TOTAL, 8)            # 40 (sublane-aligned combined table)


def _embedding_kernel(ids_ref, table_ref, gamma_ref, beta_ref, out_ref):
    ids = ids_ref[...]                    # (R, 3) int32, offsets pre-applied
    R = ids.shape[0]

    # Combined one-hot: three disjoint id ranges -> OR of three compares,
    # then ONE MXU matmul performs gather + 3-way sum.
    iota = lax.broadcasted_iota(jnp.int32, (R, K_PAD), 1)
    hit = jnp.logical_or(
        jnp.logical_or(ids[:, 0:1] == iota, ids[:, 1:2] == iota),
        ids[:, 2:3] == iota)
    onehot = hit.astype(jnp.float32)      # (R, K_PAD)

    emb = jnp.dot(onehot, table_ref[...],
                  preferred_element_type=jnp.float32)   # (R, D) f32

    # LayerNorm over the last (d_model) axis, f32, two-pass centered variance.
    mean = jnp.mean(emb, axis=-1, keepdims=True)
    centered = emb - mean
    var = jnp.mean(centered * centered, axis=-1, keepdims=True)
    inv = lax.rsqrt(var + LN_EPS)
    out_ref[...] = centered * inv * gamma_ref[...] + beta_ref[...]


def embedding_forward(x, seg, tok_tab, pos_tab, seg_tab, gamma, beta,
                      *, block_rows=512):
    """x, seg: (B, S) integer token / segment ids. Returns (B, S, D_MODEL) f32."""
    B, S = x.shape
    assert S <= MAXLEN, f"sequence length {S} exceeds maxlen={MAXLEN}"
    BS = B * S

    # pos = arange(seq_len) expanded over the batch (as in the PyTorch forward).
    pos = jnp.broadcast_to(jnp.arange(S, dtype=jnp.int32)[None, :], (B, S))

    # Clamp ids to valid ranges (nn.Embedding would raise on OOB; one-hot
    # would silently zero them).
    tok_ids = jnp.clip(x.astype(jnp.int32), 0, VOCAB_SIZE - 1)
    seg_ids = jnp.clip(seg.astype(jnp.int32), 0, N_SEGMENTS - 1)

    # Pack the three id streams into one (BS, 3) int32 array with the
    # combined-table offsets pre-applied.
    ids = jnp.stack(
        [tok_ids.reshape(BS),
         pos.reshape(BS) + POS_OFFSET,
         seg_ids.reshape(BS) + SEG_OFFSET],
        axis=-1).astype(jnp.int32)                      # (BS, 3)

    # Combined embedding table, padded to a sublane multiple of rows.
    table = jnp.zeros((K_PAD, D_MODEL), jnp.float32)
    table = table.at[:VOCAB_SIZE].set(tok_tab.astype(jnp.float32))
    table = table.at[POS_OFFSET:POS_OFFSET + MAXLEN].set(
        pos_tab.astype(jnp.float32))
    table = table.at[SEG_OFFSET:SEG_OFFSET + N_SEGMENTS].set(
        seg_tab.astype(jnp.float32))

    gamma2d = gamma.reshape(1, D_MODEL).astype(jnp.float32)
    beta2d = beta.reshape(1, D_MODEL).astype(jnp.float32)

    # Effective block size: cap by the requested block_rows, but keep >= 2
    # grid steps when there is enough work (so v7x megacore shards the
    # "parallel" row axis across both TensorCores).
    rows_for_two_steps = _round_up(max(pl.cdiv(BS, 2), 8), 8)
    blk = max(8, min(block_rows, rows_for_two_steps))

    # Pad rows to a block multiple; pad id 0 is valid, extra rows are sliced off.
    BS_pad = _round_up(BS, blk)
    if BS_pad != BS:
        ids = jnp.pad(ids, ((0, BS_pad - BS), (0, 0)))

    grid = (BS_pad // blk,)

    out = pl.pallas_call(
        _embedding_kernel,
        out_shape=jax.ShapeDtypeStruct((BS_pad, D_MODEL), jnp.float32),
        grid_spec=pltpu.PrefetchScalarGridSpec(
            num_scalar_prefetch=0,
            grid=grid,
            in_specs=[
                pl.BlockSpec((blk, 3), lambda i: (i, 0)),        # packed ids
                pl.BlockSpec((K_PAD, D_MODEL), lambda i: (0, 0)),  # table
                pl.BlockSpec((1, D_MODEL), lambda i: (0, 0)),    # LN gamma
                pl.BlockSpec((1, D_MODEL), lambda i: (0, 0)),    # LN beta
            ],
            out_specs=pl.BlockSpec((blk, D_MODEL), lambda i: (i, 0)),
        ),
        compiler_params=pltpu.CompilerParams(
            dimension_semantics=("parallel",),
            vmem_limit_bytes=32 * 1024 * 1024),
    )(ids, table, gamma2d, beta2d)

    return out[:BS].reshape(B, S, D_MODEL)


def _reference(x, seg, tok_tab, pos_tab, seg_tab, gamma, beta):
    B, S = x.shape
    pos = jnp.broadcast_to(jnp.arange(S, dtype=jnp.int32)[None, :], (B, S))
    emb = tok_tab[x] + pos_tab[pos] + seg_tab[seg]
    mean = jnp.mean(emb, axis=-1, keepdims=True)
    var = jnp.mean((emb - mean) ** 2, axis=-1, keepdims=True)
    return (emb - mean) / jnp.sqrt(var + LN_EPS) * gamma + beta


if __name__ == "__main__":
    key = jax.random.PRNGKey(0)
    k_tok, k_pos, k_seg, k_x, k_s = jax.random.split(key, 5)

    # Deterministic parameter init (nn.Embedding ~ N(0,1); LayerNorm = 1/0).
    tok_tab = jax.random.normal(k_tok, (VOCAB_SIZE, D_MODEL), jnp.float32)
    pos_tab = jax.random.normal(k_pos, (MAXLEN, D_MODEL), jnp.float32)
    seg_tab = jax.random.normal(k_seg, (N_SEGMENTS, D_MODEL), jnp.float32)
    gamma = jnp.ones((D_MODEL,), jnp.float32)
    beta = jnp.zeros((D_MODEL,), jnp.float32)

    # Small example inputs: batch=2, seq=8 (<= maxlen=30).
    B, S = 2, 8
    x = jax.random.randint(k_x, (B, S), 0, VOCAB_SIZE, dtype=jnp.int32)
    seg = jax.random.randint(k_s, (B, S), 0, N_SEGMENTS, dtype=jnp.int32)

    out = embedding_forward(x, seg, tok_tab, pos_tab, seg_tab, gamma, beta)
    out = jax.block_until_ready(out)

    ref = _reference(x, seg, tok_tab, pos_tab, seg_tab, gamma, beta)
    assert out.shape == (B, S, D_MODEL)
    assert jnp.allclose(out, ref, atol=1e-4, rtol=1e-4), "mismatch vs reference"

    print("KERNEL_OK")
</pallas_src>

<mosaic_0001>
module attributes {stable_mosaic.version = 11 : i64} {
  func.func @_embedding_kernel(%arg0: i32, %arg1: memref<8x3xi32, #tpu.memory_space<vmem>>, %arg2: memref<40x768xf32, #tpu.memory_space<vmem>>, %arg3: memref<1x768xf32, #tpu.memory_space<vmem>>, %arg4: memref<1x768xf32, #tpu.memory_space<vmem>>, %arg5: memref<8x768xf32, #tpu.memory_space<vmem>>) attributes {dimension_semantics = [#tpu.dimension_semantics<parallel>], iteration_bounds = array<i64: 2>, scalar_prefetch = 0 : i64, scratch_operands = 0 : i64, tpu.core_type = #tpu.core_type<tc>, window_params = [{transform_indices = @transform_0, window_bounds = array<i64: 8, 3>}, {pipeline_mode = #tpu.pipeline_mode<synchronous>, transform_indices = @transform_1, window_bounds = array<i64: 40, 768>}, {pipeline_mode = #tpu.pipeline_mode<synchronous>, transform_indices = @transform_2, window_bounds = array<i64: 1, 768>}, {pipeline_mode = #tpu.pipeline_mode<synchronous>, transform_indices = @transform_3, window_bounds = array<i64: 1, 768>}, {transform_indices = @transform_4, window_bounds = array<i64: 8, 768>}]} {
    %c0 = arith.constant 0 : index
    %c0_0 = arith.constant 0 : index
    %0 = vector.load %arg1[%c0, %c0_0] : memref<8x3xi32, #tpu.memory_space<vmem>>, vector<8x3xi32>
    %1 = tpu.iota {dimensions = array<i32: 1>} : vector<8x40xi32>
    %2 = vector.extract_strided_slice %0 {offsets = [0, 0], sizes = [8, 1], strides = [1, 1]} : vector<8x3xi32> to vector<8x1xi32>
    %3 = vector.broadcast %2 : vector<8x1xi32> to vector<8x40xi32>
    %4 = arith.cmpi eq, %3, %1 : vector<8x40xi32>
    %5 = vector.extract_strided_slice %0 {offsets = [0, 1], sizes = [8, 1], strides = [1, 1]} : vector<8x3xi32> to vector<8x1xi32>
    %6 = vector.broadcast %5 : vector<8x1xi32> to vector<8x40xi32>
    %7 = arith.cmpi eq, %6, %1 : vector<8x40xi32>
    %8 = arith.ori %4, %7 : vector<8x40xi1>
    %9 = vector.extract_strided_slice %0 {offsets = [0, 2], sizes = [8, 1], strides = [1, 1]} : vector<8x3xi32> to vector<8x1xi32>
    %10 = vector.broadcast %9 : vector<8x1xi32> to vector<8x40xi32>
    %11 = arith.cmpi eq, %10, %1 : vector<8x40xi32>
    %12 = arith.ori %8, %11 : vector<8x40xi1>
    %13 = arith.extui %12 : vector<8x40xi1> to vector<8x40xi32>
    %14 = arith.sitofp %13 : vector<8x40xi32> to vector<8x40xf32>
    %c0_1 = arith.constant 0 : index
    %c0_2 = arith.constant 0 : index
    %15 = vector.load %arg2[%c0_1, %c0_2] : memref<40x768xf32, #tpu.memory_space<vmem>>, vector<40x768xf32>
    %cst = arith.constant dense<0.000000e+00> : vector<8x768xf32>
    %16 = tpu.matmul %14, %15, %cst {dimension_numbers = #tpu.dot_dimension_numbers<[1], [0], [0], [1], [0, 0, 1, 1], [], []>} : vector<8x40xf32>, vector<40x768xf32>, vector<8x768xf32> -> vector<8x768xf32>
    %cst_3 = arith.constant dense<0.000000e+00> : vector<8xf32>
    %17 = vector.multi_reduction <add>, %16, %cst_3 [1] : vector<8x768xf32> to vector<8xf32>
    %18 = vector.shape_cast %17 : vector<8xf32> to vector<8x1xf32>
    %cst_4 = arith.constant 7.680000e+02 : f32
    %19 = vector.broadcast %cst_4 : f32 to vector<8x1xf32>
    %20 = arith.divf %18, %19 : vector<8x1xf32>
    %21 = vector.broadcast %20 : vector<8x1xf32> to vector<8x768xf32>
    %22 = arith.subf %16, %21 : vector<8x768xf32>
    %23 = arith.mulf %22, %22 : vector<8x768xf32>
    %cst_5 = arith.constant dense<0.000000e+00> : vector<8xf32>
    %24 = vector.multi_reduction <add>, %23, %cst_5 [1] : vector<8x768xf32> to vector<8xf32>
    %25 = vector.shape_cast %24 : vector<8xf32> to vector<8x1xf32>
    %cst_6 = arith.constant 7.680000e+02 : f32
    %26 = vector.broadcast %cst_6 : f32 to vector<8x1xf32>
    %27 = arith.divf %25, %26 : vector<8x1xf32>
    %cst_7 = arith.constant 9.99999974E-6 : f32
    %28 = vector.broadcast %cst_7 : f32 to vector<8x1xf32>
    %29 = arith.addf %27, %28 : vector<8x1xf32>
    %30 = math.rsqrt %29 : vector<8x1xf32>
    %31 = vector.broadcast %30 : vector<8x1xf32> to vector<8x768xf32>
    %32 = arith.mulf %22, %31 : vector<8x768xf32>
    %c0_8 = arith.constant 0 : index
    %c0_9 = arith.constant 0 : index
    %33 = vector.load %arg3[%c0_8, %c0_9] : memref<1x768xf32, #tpu.memory_space<vmem>>, vector<1x768xf32>
    %34 = vector.broadcast %33 : vector<1x768xf32> to vector<8x768xf32>
    %35 = arith.mulf %32, %34 : vector<8x768xf32>
    %c0_10 = arith.constant 0 : index
    %c0_11 = arith.constant 0 : index
    %36 = vector.load %arg4[%c0_10, %c0_11] : memref<1x768xf32, #tpu.memory_space<vmem>>, vector<1x768xf32>
    %37 = vector.broadcast %36 : vector<1x768xf32> to vector<8x768xf32>
    %38 = arith.addf %35, %37 : vector<8x768xf32>
    %c0_12 = arith.constant 0 : index
    %c0_13 = arith.constant 0 : index
    %39 = vector.load %arg5[%c0_12, %c0_13] : memref<8x768xf32, #tpu.memory_space<vmem>>, vector<8x768xf32>
    tpu.vector_store %arg5[%c0_12, %c0_13], %38 {strides = array<i32>} : memref<8x768xf32, #tpu.memory_space<vmem>>, vector<8x768xf32>,
    return
  }
  func.func @transform_0(%arg0: i32) -> (i32, i32) {
    %c0_i32 = arith.constant 0 : i32
    %c0_i32_0 = arith.constant 0 : i32
    return %arg0, %c0_i32 : i32, i32
  }
  func.func @transform_1(%arg0: i32) -> (i32, i32) {
    %c0_i32 = arith.constant 0 : i32
    %c0_i32_0 = arith.constant 0 : i32
    %c0_i32_1 = arith.constant 0 : i32
    return %c0_i32, %c0_i32_0 : i32, i32
  }
  func.func @transform_2(%arg0: i32) -> (i32, i32) {
    %c0_i32 = arith.constant 0 : i32
    %c0_i32_0 = arith.constant 0 : i32
    %c0_i32_1 = arith.constant 0 : i32
    return %c0_i32, %c0_i32_0 : i32, i32
  }
  func.func @transform_3(%arg0: i32) -> (i32, i32) {
    %c0_i32 = arith.constant 0 : i32
    %c0_i32_0 = arith.constant 0 : i32
    %c0_i32_1 = arith.constant 0 : i32
    return %c0_i32, %c0_i32_0 : i32, i32
  }
  func.func @transform_4(%arg0: i32) -> (i32, i32) {
    %c0_i32 = arith.constant 0 : i32
    %c0_i32_0 = arith.constant 0 : i32
    return %arg0, %c0_i32 : i32, i32
  }
}

</mosaic_0001>

<llo_original>
// kernel: tpu_custom_call.1
$region0: #{tpu_custom_call.1}
  #allocation0 [shape = 'u32[]', space=smem, size = 0x4, offset = 0x4, fixed_abs, tag = 'smem constant byte address 0x4 - core index']
  #allocation1 [shape = 'u32[72,128]{1,0:T(1,128)}', space=vmem, size = 0x9000, scoped, tag = 'internal scratch']
  %s0 = inlined_call_operand.vmem [shape: s32[16,3], index: 0, kind: input, shape index: {}]
  %s1 = inlined_call_operand.hbm [shape: f32[40,768], index: 1, kind: input, shape index: {}]
  %s2 = inlined_call_operand.vmem [shape: f32[1,768], index: 2, kind: input, shape index: {}]
  %s3 = inlined_call_operand.vmem [shape: f32[1,768], index: 3, kind: input, shape index: {}]
  %s4 = inlined_call_operand.hbm [shape: f32[16,768], index: 4, kind: output, shape index: {}]
  %s5 = sld [smem:[#allocation0]]
  $region53: #{tpu_custom_call.1} parent=0
    _
  %s7 = ssub.s32 1, %s5
  %s8 = scalar_select 0, %s7, %s5
  $region1: #{tpu_custom_call.1} parent=0
    #allocation2 [shape = 'u8[122880]{0}', space=vmem, size = 0x1e000, scoped, tag = 'input window, operand 1, single buffered']
    #allocation3 [shape = 's32[2]{0}', space=sflag, size = 0x8, scoped, tag = 'scoped memory for tpu_custom_call.1']
    #allocation4 [shape = 's32[2]{0}', space=sflag, size = 0x8, scoped, tag = 'scoped memory for tpu_custom_call.1']
    #allocation5 [shape = 'u8[49152]{0}', space=vmem, size = 0xc000, scoped, tag = 'output window, operand 0']
    %9 = vsyncpa [#allocation3], 0
    %10 = vsyncpa [#allocation4], 0
    %s11 = scalar_lea.sflag [#allocation4], 1
    %12 = vsyncpa %s11, 0
    loop: start=0, step=1, limit=4
    $region2: #{tpu_custom_call.1} parent=1 // loop_pre_header
      _
    $region3: #{tpu_custom_call.1} parent=1 // loop_header
      %s14 = sphi 0, %s18
      %p15 = scmp.ge.s32.totalorder %s14, 4
      %s24 = sphi 0, %s26
      %s27 = sphi 0, %s24
      %s28 = sphi 0, %s27
      %s44 = sphi 0, %s28
      %s48 = sphi 0, %s48
      %s50 = sphi 0, %s48
      %s51 = sphi 0, %s50
      %s65 = sphi 0, %s51
      %s69 = sphi 0, %s69
      %s71 = sphi 0, %s69
      %s72 = sphi 0, %s71
      %s86 = sphi 0, %s72
      %s90 = sphi 0, %s90
      %s92 = sphi 0, %s90
      %s93 = sphi 0, %s92
      %s107 = sphi 0, %s93
      %s113 = sphi 0, %s115
      %s116 = sphi 0, %s113
      %s117 = sphi 0, %s116
      %s133 = sphi 0, %s117
    $region4: #{tpu_custom_call.1} parent=1 // loop_header_branch
      %17 = sbr.rel (%p15) target = $region8
    $region5: #{tpu_custom_call.1} parent=1 // loop_body
      %s19 = ssub.s32 %s14, 1
      %s20 = ssub.s32 %s14, 2
      %s21 = sadd.s32 %s14, 1
      %s22 = ssub.s32 %s14, %s21
      %p23 = scmp.eq.s32.totalorder %s22, 0
      %s25 = sadd.s32 %s24, 1
      %s26 = scalar_select %p23, %s24, %s25
      %p29 = pneg %p23
      %p30 = scmp.eq.s32.totalorder %s14, 1
      %p31 = por %p29, %p30
      %p32 = scmp.ne.s32.totalorder %s24, %s27
      %p33 = scmp.eq.s32.totalorder %s14, 0
      %p34 = por %p32, %p33
      %p35 = scmp.ne.s32.totalorder %s24, %s27
      %p36 = scmp.eq.s32.totalorder %s19, 1
      %p37 = por %p35, %p36
      %p38 = scmp.ne.s32.totalorder %s27, %s28
      %p39 = scmp.eq.s32.totalorder %s19, 0
      %p40 = por %p38, %p39
      %p41 = scmp.ne.s32.totalorder %s27, %s28
      %p42 = scmp.eq.s32.totalorder %s20, 1
      %p43 = por %p41, %p42
      %p45 = scmp.ne.s32.totalorder %s28, %s44
      %p46 = scmp.eq.s32.totalorder %s20, 0
      %p47 = por %p45, %p46
      %s49 = sadd.s32 %s48, 1
      %p52 = scmp.eq.s32.totalorder %s14, 1
      %p53 = scmp.ne.s32.totalorder %s48, %s50
      %p54 = scmp.eq.s32.totalorder %s14, 0
      %p55 = por %p53, %p54
      %p56 = scmp.ne.s32.totalorder %s48, %s50
      %p57 = scmp.eq.s32.totalorder %s19, 1
      %p58 = por %p56, %p57
      %p59 = scmp.ne.s32.totalorder %s50, %s51
      %p60 = scmp.eq.s32.totalorder %s19, 0
      %p61 = por %p59, %p60
      %p62 = scmp.ne.s32.totalorder %s50, %s51
      %p63 = scmp.eq.s32.totalorder %s20, 1
      %p64 = por %p62, %p63
      %p66 = scmp.ne.s32.totalorder %s51, %s65
      %p67 = scmp.eq.s32.totalorder %s20, 0
      %p68 = por %p66, %p67
      %s70 = sadd.s32 %s69, 1
      %p73 = scmp.eq.s32.totalorder %s14, 1
      %p74 = scmp.ne.s32.totalorder %s69, %s71
      %p75 = scmp.eq.s32.totalorder %s14, 0
      %p76 = por %p74, %p75
      %p77 = scmp.ne.s32.totalorder %s69, %s71
      %p78 = scmp.eq.s32.totalorder %s19, 1
      %p79 = por %p77, %p78
      %p80 = scmp.ne.s32.totalorder %s71, %s72
      %p81 = scmp.eq.s32.totalorder %s19, 0
      %p82 = por %p80, %p81
      %p83 = scmp.ne.s32.totalorder %s71, %s72
      %p84 = scmp.eq.s32.totalorder %s20, 1
      %p85 = por %p83, %p84
      %p87 = scmp.ne.s32.totalorder %s72, %s86
      %p88 = scmp.eq.s32.totalorder %s20, 0
      %p89 = por %p87, %p88
      %s91 = sadd.s32 %s90, 1
      %p94 = scmp.eq.s32.totalorder %s14, 1
      %p95 = scmp.ne.s32.totalorder %s90, %s92
      %p96 = scmp.eq.s32.totalorder %s14, 0
      %p97 = por %p95, %p96
      %p98 = scmp.ne.s32.totalorder %s90, %s92
      %p99 = scmp.eq.s32.totalorder %s19, 1
      %p100 = por %p98, %p99
      %p101 = scmp.ne.s32.totalorder %s92, %s93
      %p102 = scmp.eq.s32.totalorder %s19, 0
      %p103 = por %p101, %p102
      %p104 = scmp.ne.s32.totalorder %s92, %s93
      %p105 = scmp.eq.s32.totalorder %s20, 1
      %p106 = por %p104, %p105
      %p108 = scmp.ne.s32.totalorder %s93, %s107
      %p109 = scmp.eq.s32.totalorder %s20, 0
      %p110 = por %p108, %p109
      %s111 = ssub.s32 %s14, %s21
      %p112 = scmp.eq.s32.totalorder %s111, 0
      %s114 = sadd.s32 %s113, 1
      %s115 = scalar_select %p112, %s113, %s114
      %p118 = pneg %p112
      %p119 = scmp.eq.s32.totalorder %s14, 1
      %p120 = por %p118, %p119
      %p121 = scmp.ne.s32.totalorder %s113, %s116
      %p122 = scmp.eq.s32.totalorder %s14, 0
      %p123 = por %p121, %p122
      %p124 = scmp.ne.s32.totalorder %s113, %s116
      %p125 = scmp.eq.s32.totalorder %s19, 1
      %p126 = por %p124, %p125
      %p127 = scmp.ne.s32.totalorder %s116, %s117
      %p128 = scmp.eq.s32.totalorder %s19, 0
      %p129 = por %p127, %p128
      %p130 = scmp.ne.s32.totalorder %s116, %s117
      %p131 = scmp.eq.s32.totalorder %s20, 1
      %p132 = por %p130, %p131
      %p134 = scmp.ne.s32.totalorder %s117, %s133
      %p135 = scmp.eq.s32.totalorder %s20, 0
      %p136 = por %p134, %p135
      %p137 = scmp.le.s32.totalorder 1, %s14
      %p138 = scmp.lt.s32.totalorder %s14, 3
      %p139 = pnand %p137, %p138
      %p140 = pneg %p139
      // Predicated region
      $region9: #{tpu_custom_call.1} parent=5 // pred_check
        _
      $region10: #{tpu_custom_call.1} parent=5 // pred_check_branch
        %142 = sbr.rel (%p139) target = $region12
      $region11: #{tpu_custom_call.1} parent=5 // pred_region
        %s143 = ssub.s32 %s14, 1
        // Predicated region
        $region13: #{tpu_custom_call.1} parent=11 // pred_check
          %p144 = pneg %p61
        $region14: #{tpu_custom_call.1} parent=11 // pred_check_branch
          %146 = sbr.rel (%p144) target = $region16
        $region15: #{tpu_custom_call.1} parent=11 // pred_region
          %148 = vsyncadd [#allocation3], 0
          %s149 = sshll.u32 %s1, 4
          %s150 = int_to_ptr.hbm [resolvable:$true] %s149
          %s151 = sshll.u32 [#allocation2], 4
          %s152 = int_to_ptr.vmem [resolvable:$true] %s151
          %157 = dma.hbm_to_vmem [thread:$0]  %s150, 3840, %s152, [#allocation3], 768, 768, 48
        $region16: #{tpu_custom_call.1} parent=11 // pred_fallthru
          _
        // Predicated region
        $region17: #{tpu_custom_call.1} parent=11 // pred_check
          %p158 = pneg %p82
        $region18: #{tpu_custom_call.1} parent=11 // pred_check_branch
          %160 = sbr.rel (%p158) target = $region20
        $region19: #{tpu_custom_call.1} parent=11 // pred_region
          _
        $region20: #{tpu_custom_call.1} parent=11 // pred_fallthru
          _
        // Predicated region
        $region21: #{tpu_custom_call.1} parent=11 // pred_check
          %p161 = pneg %p103
        $region22: #{tpu_custom_call.1} parent=11 // pred_check_branch
          %163 = sbr.rel (%p161) target = $region24
        $region23: #{tpu_custom_call.1} parent=11 // pred_region
          _
        $region24: #{tpu_custom_call.1} parent=11 // pred_fallthru
          _
      $region12: #{tpu_custom_call.1} parent=5 // pred_fallthru
        _
      %p164 = scmp.lt.s32.totalorder %s14, 2
      // Predicated region
      $region25: #{tpu_custom_call.1} parent=5 // pred_check
        %p165 = pneg %p164
      $region26: #{tpu_custom_call.1} parent=5 // pred_check_branch
        %167 = sbr.rel (%p165) target = $region28
      $region27: #{tpu_custom_call.1} parent=5 // pred_region
        // Predicated region
        $region29: #{tpu_custom_call.1} parent=27 // pred_check
          %p168 = pneg %p34
        $region30: #{tpu_custom_call.1} parent=27 // pred_check_branch
          %170 = sbr.rel (%p168) target = $region32
        $region31: #{tpu_custom_call.1} parent=27 // pred_region
          %p171 = scmp.lt.s32.totalorder %s14, 1
          %s172 = scalar_select %p171, %s14, 1
          %s173 = smul.addr %s172, 8
          %s174 = scalar_lea.vmem %s0, %s173
        $region32: #{tpu_custom_call.1} parent=27 // pred_fallthru
          _
      $region28: #{tpu_custom_call.1} parent=5 // pred_fallthru
        _
      %p175 = scmp.le.s32.totalorder 1, %s14
      %p176 = scmp.lt.s32.totalorder %s14, 3
      %p177 = pnand %p175, %p176
      %p178 = pneg %p177
      // Predicated region
      $region33: #{tpu_custom_call.1} parent=5 // pred_check
        _
      $region34: #{tpu_custom_call.1} parent=5 // pred_check_branch
        %180 = sbr.rel (%p177) target = $region36
      $region35: #{tpu_custom_call.1} parent=5 // pred_region
        %s181 = ssub.s32 %s14, 1
        // Predicated region
        $region37: #{tpu_custom_call.1} parent=35 // pred_check
          %p182 = pneg %p61
        $region38: #{tpu_custom_call.1} parent=35 // pred_check_branch
          %184 = sbr.rel (%p182) target = $region40
        $region39: #{tpu_custom_call.1} parent=35 // pred_region
          %186 = dma.done [#allocation3], 3840
        $region40: #{tpu_custom_call.1} parent=35 // pred_fallthru
          _
        %p187 = scmp.lt.s32.totalorder %s19, 1
        %s188 = scalar_select %p187, %s19, 1
        %s189 = smul.addr %s188, 8
        %s190 = scalar_lea.vmem %s0, %s189
        %p191 = pneg %p40
        %p192 = pneg %p37
        %p193 = pneg %p61
        %p194 = pneg %p58
        %p195 = pneg %p82
        %p196 = pneg %p79
        %p197 = pneg %p103
        %p198 = pneg %p100
        %p199 = pneg %p129
        %p200 = pneg %p126
        %s201 = sand.u32 %s116, 1
        %s202 = scalar_lea.sflag [#allocation4], %s201
        %s203 = sand.u32 %s116, 1
        %s204 = smul.addr %s203, 48
        %s205 = scalar_lea.vmem [#allocation5], %s204
        %p206 = scmp.lt.s32.totalorder %s19, 1
        %s207 = scalar_select %p206, %s19, 1
        %s208 = smul.addr %s207, 8
        %s209 = scalar_lea.vmem %s0, %s208
        %v210 = vld [vmem:[%s209] sm:$0xff]
        %v211 = vlaneseq
        %v212 = vand.u32 %v211, 127
        %213 = vset.pattern.permute.xlu0 0
        %214 = vperm.xlu0 %213, %v210
        %v215 = vpop.permute.xlu0 %214
        %vm216 = vcmp.eq.s32.totalorder %v215, %v212
        %217 = vset.pattern.permute.xlu0 1
        %218 = vperm.xlu0 %217, %v210
        %v219 = vpop.permute.xlu0 %218
        %vm220 = vcmp.eq.s32.totalorder %v219, %v212
        %vm221 = vmor %vm216, %vm220
        %222 = vset.pattern.permute.xlu0 2
        %223 = vperm.xlu0 %222, %v210
        %v224 = vpop.permute.xlu0 %223
        %vm225 = vcmp.eq.s32.totalorder %v224, %v212
        %vm226 = vmor %vm221, %vm225
        %v227 = vsel %vm226, 1, 0
        %v228 = vcvt.s32.f32 %v227
        %v229 = vld [vmem:[#allocation2] sm:$0xff]
        %v230 = vld [vmem:[#allocation2 + $0x8] sm:$0xff]
        %v231 = vld [vmem:[#allocation2 + $0x10] sm:$0xff]
        %v232 = vld [vmem:[#allocation2 + $0x18] sm:$0xff]
        %v233 = vld [vmem:[#allocation2 + $0x20] sm:$0xff]
        %v234 = vld [vmem:[#allocation2 + $0x28] sm:$0xff]
        %v235 = vld [vmem:[#allocation2 + $0x30] sm:$0xff]
        %v236 = vld [vmem:[#allocation2 + $0x38] sm:$0xff]
        %v237 = vld [vmem:[#allocation2 + $0x40] sm:$0xff]
        %v238 = vld [vmem:[#allocation2 + $0x48] sm:$0xff]
        %v239 = vld [vmem:[#allocation2 + $0x50] sm:$0xff]
        %v240 = vld [vmem:[#allocation2 + $0x58] sm:$0xff]
        %v241 = vld [vmem:[#allocation2 + $0x60] sm:$0xff]
        %v242 = vld [vmem:[#allocation2 + $0x68] sm:$0xff]
        %v243 = vld [vmem:[#allocation2 + $0x70] sm:$0xff]
        %v244 = vld [vmem:[#allocation2 + $0x78] sm:$0xff]
        %v245 = vld [vmem:[#allocation2 + $0x80] sm:$0xff]
        %v246 = vld [vmem:[#allocation2 + $0x88] sm:$0xff]
        %v247 = vld [vmem:[#allocation2 + $0x90] sm:$0xff]
        %v248 = vld [vmem:[#allocation2 + $0x98] sm:$0xff]
        %v249 = vld [vmem:[#allocation2 + $0xa0] sm:$0xff]
        %v250 = vld [vmem:[#allocation2 + $0xa8] sm:$0xff]
        %v251 = vld [vmem:[#allocation2 + $0xb0] sm:$0xff]
        %v252 = vld [vmem:[#allocation2 + $0xb8] sm:$0xff]
        %v253 = vld [vmem:[#allocation2 + $0xc0] sm:$0xff]
        %v254 = vld [vmem:[#allocation2 + $0xc8] sm:$0xff]
        %v255 = vld [vmem:[#allocation2 + $0xd0] sm:$0xff]
        %v256 = vld [vmem:[#allocation2 + $0xd8] sm:$0xff]
        %v257 = vld [vmem:[#allocation2 + $0xe0] sm:$0xff]
        %v258 = vld [vmem:[#allocation2 + $0xe8] sm:$0xff]
        %vm259 = vcmask 326656
        %v261 = vsel %vm259, %v228, 0
        %263 = vmatpush.msra.mxu0 0.0
        %264 = vmatpush.msra.mxu0 0.0
        %265 = vmatpush.msra.mxu0 0.0
        %266 = vmatpush.msra.mxu0 0.0
        %267 = vmatpush.msra.mxu0 0.0
        %268 = vmatpush.msra.mxu0 0.0
        %269 = vmatpush.msra.mxu0 0.0
        %270 = vmatpush.msra.mxu0 0.0
        %271 = vmatpush.msra.mxu0 0.0
        %272 = vmatpush.msra.mxu0 0.0
        %273 = vmatpush.msra.mxu0 0.0
        %274 = vmatpush.msra.mxu0 %v253
        %275 = vmatpush.msra.mxu0 %v247
        %276 = vmatpush.msra.mxu0 %v241
        %277 = vmatpush.msra.mxu0 %v235
        %278 = vmatpush.msra.mxu0 %v229
        %279 = vmatmul.f32.gmra.mxu0 %v261
        %v280 = vpop.f32.mrf.mxu0
        %v281 = vadd.f32 0.0, %v280
        %282 = vdwg.mxu0
        %283 = vmatpush.msra.mxu0 0.0
        %284 = vmatpush.msra.mxu0 0.0
        %285 = vmatpush.msra.mxu0 0.0
        %286 = vmatpush.msra.mxu0 0.0
        %287 = vmatpush.msra.mxu0 0.0
        %288 = vmatpush.msra.mxu0 0.0
        %289 = vmatpush.msra.mxu0 0.0
        %290 = vmatpush.msra.mxu0 0.0
        %291 = vmatpush.msra.mxu0 0.0
        %292 = vmatpush.msra.mxu0 0.0
        %293 = vmatpush.msra.mxu0 0.0
        %294 = vmatpush.msra.mxu0 %v254
        %295 = vmatpush.msra.mxu0 %v248
        %296 = vmatpush.msra.mxu0 %v242
        %297 = vmatpush.msra.mxu0 %v236
        %298 = vmatpush.msra.mxu0 %v230
        %299 = vmatmul.f32.gmra.mxu0 %v261
        %v300 = vpop.f32.mrf.mxu0
        %v301 = vadd.f32 0.0, %v300
        %302 = vdwg.mxu0
        %303 = vmatpush.msra.mxu0 0.0
        %304 = vmatpush.msra.mxu0 0.0
        %305 = vmatpush.msra.mxu0 0.0
        %306 = vmatpush.msra.mxu0 0.0
        %307 = vmatpush.msra.mxu0 0.0
        %308 = vmatpush.msra.mxu0 0.0
        %309 = vmatpush.msra.mxu0 0.0
        %310 = vmatpush.msra.mxu0 0.0
        %311 = vmatpush.msra.mxu0 0.0
        %312 = vmatpush.msra.mxu0 0.0
        %313 = vmatpush.msra.mxu0 0.0
        %314 = vmatpush.msra.mxu0 %v255
        %315 = vmatpush.msra.mxu0 %v249
        %316 = vmatpush.msra.mxu0 %v243
        %317 = vmatpush.msra.mxu0 %v237
        %318 = vmatpush.msra.mxu0 %v231
        %319 = vmatmul.f32.gmra.mxu0 %v261
        %v320 = vpop.f32.mrf.mxu0
        %v321 = vadd.f32 0.0, %v320
        %322 = vdwg.mxu0
        %323 = vmatpush.msra.mxu0 0.0
        %324 = vmatpush.msra.mxu0 0.0
        %325 = vmatpush.msra.mxu0 0.0
        %326 = vmatpush.msra.mxu0 0.0
        %327 = vmatpush.msra.mxu0 0.0
        %328 = vmatpush.msra.mxu0 0.0
        %329 = vmatpush.msra.mxu0 0.0
        %330 = vmatpush.msra.mxu0 0.0
        %331 = vmatpush.msra.mxu0 0.0
        %332 = vmatpush.msra.mxu0 0.0
        %333 = vmatpush.msra.mxu0 0.0
        %334 = vmatpush.msra.mxu0 %v256
        %335 = vmatpush.msra.mxu0 %v250
        %336 = vmatpush.msra.mxu0 %v244
        %337 = vmatpush.msra.mxu0 %v238
        %338 = vmatpush.msra.mxu0 %v232
        %339 = vmatmul.f32.gmra.mxu0 %v261
        %v340 = vpop.f32.mrf.mxu0
        %v341 = vadd.f32 0.0, %v340
        %342 = vdwg.mxu0
        %343 = vmatpush.msra.mxu0 0.0
        %344 = vmatpush.msra.mxu0 0.0
        %345 = vmatpush.msra.mxu0 0.0
        %346 = vmatpush.msra.mxu0 0.0
        %347 = vmatpush.msra.mxu0 0.0
        %348 = vmatpush.msra.mxu0 0.0
        %349 = vmatpush.msra.mxu0 0.0
        %350 = vmatpush.msra.mxu0 0.0
        %351 = vmatpush.msra.mxu0 0.0
        %352 = vmatpush.msra.mxu0 0.0
        %353 = vmatpush.msra.mxu0 0.0
        %354 = vmatpush.msra.mxu0 %v257
        %355 = vmatpush.msra.mxu0 %v251
        %356 = vmatpush.msra.mxu0 %v245
        %357 = vmatpush.msra.mxu0 %v239
        %358 = vmatpush.msra.mxu0 %v233
        %359 = vmatmul.f32.gmra.mxu0 %v261
        %v360 = vpop.f32.mrf.mxu0
        %v361 = vadd.f32 0.0, %v360
        %362 = vdwg.mxu0
        %363 = vmatpush.msra.mxu0 0.0
        %364 = vmatpush.msra.mxu0 0.0
        %365 = vmatpush.msra.mxu0 0.0
        %366 = vmatpush.msra.mxu0 0.0
        %367 = vmatpush.msra.mxu0 0.0
        %368 = vmatpush.msra.mxu0 0.0
        %369 = vmatpush.msra.mxu0 0.0
        %370 = vmatpush.msra.mxu0 0.0
        %371 = vmatpush.msra.mxu0 0.0
        %372 = vmatpush.msra.mxu0 0.0
        %373 = vmatpush.msra.mxu0 0.0
        %374 = vmatpush.msra.mxu0 %v258
        %375 = vmatpush.msra.mxu0 %v252
        %376 = vmatpush.msra.mxu0 %v246
        %377 = vmatpush.msra.mxu0 %v240
        %378 = vmatpush.msra.mxu0 %v234
        %379 = vmatmul.f32.gmra.mxu0 %v261
        %v380 = vpop.f32.mrf.mxu0
        %v381 = vadd.f32 0.0, %v380
        %382 = vdwg.mxu0
        %v383 = vadd.f32 %v281, %v301
        %v384 = vadd.f32 %v383, %v321
        %v385 = vadd.f32 %v384, %v341
        %v386 = vadd.f32 %v385, %v361
        %v387 = vadd.f32 %v386, %v381
        %388 = vadd.xlane.f32.xlu0 %v387
        %v389 = vpop.xlane.xlu0 %388
        %v390 = vrcp.pop 768.0
        %v391 = vmul.f32 768.0, %v390
        %v392 = vsub.f32 1.0, %v391
        %v393 = vmul.f32 %v390, %v392
        %v394 = vadd.f32 %v390, %v393
        %vm395 = vweird.f32 %v390
        %v396 = vsel %vm395, %v390, %v394
        %v397 = vmul.f32 %v389, %v396
        %v398 = vsub.f32 %v281, %v397
        %v399 = vsub.f32 %v301, %v397
        %v400 = vsub.f32 %v321, %v397
        %v401 = vsub.f32 %v341, %v397
        %v402 = vsub.f32 %v361, %v397
        %v403 = vsub.f32 %v381, %v397
        %v404 = vmul.f32 %v398, %v398
        %v405 = vmul.f32 %v399, %v399
        %v406 = vmul.f32 %v400, %v400
        %v407 = vmul.f32 %v401, %v401
        %v408 = vmul.f32 %v402, %v402
        %v409 = vmul.f32 %v403, %v403
        %v410 = vadd.f32 %v404, %v405
        %v411 = vadd.f32 %v410, %v406
        %v412 = vadd.f32 %v411, %v407
        %v413 = vadd.f32 %v412, %v408
        %v414 = vadd.f32 %v413, %v409
        %415 = vadd.xlane.f32.xlu0 %v414
        %v416 = vpop.xlane.xlu0 %415
        %v417 = vmul.f32 %v416, %v396
        %v418 = vadd.f32 %v417, 1e-05
        %v419 = vrsqrt.pop %v418
        %v420 = vmul.f32 %v419, %v418
        %v421 = vmul.f32 %v420, %v419
        %v422 = vmul.f32 0.5, %v421
        %v423 = vsub.f32 1.5, %v422
        %v424 = vmul.f32 %v419, %v423
        %vm425 = vweird.f32 %v418
        %vm426 = vweird.f32 %v419
        %vm427 = vmor %vm425, %vm426
        %v428 = vsel %vm427, %v419, %v424
        %v429 = vmul.f32 %v398, %v428
        %v430 = vmul.f32 %v399, %v428
        %v431 = vmul.f32 %v400, %v428
        %v432 = vmul.f32 %v401, %v428
        %v433 = vmul.f32 %v402, %v428
        %v434 = vmul.f32 %v403, %v428
        %v435 = vld [vmem:[%s2] sm:$0x3f]
        %v437 = vperm.slane %v435, 0
        %v438 = vperm.slane %v435, 1
        %v439 = vperm.slane %v435, 2
        %v440 = vperm.slane %v435, 3
        %v441 = vperm.slane %v435, 4
        %v442 = vperm.slane %v435, 5
        %v449 = vmul.f32 %v429, %v437
        %v450 = vmul.f32 %v430, %v438
        %v451 = vmul.f32 %v431, %v439
        %v452 = vmul.f32 %v432, %v440
        %v453 = vmul.f32 %v433, %v441
        %v454 = vmul.f32 %v434, %v442
        %v455 = vld [vmem:[%s3] sm:$0x3f]
        %v457 = vperm.slane %v455, 0
        %v458 = vperm.slane %v455, 1
        %v459 = vperm.slane %v455, 2
        %v460 = vperm.slane %v455, 3
        %v461 = vperm.slane %v455, 4
        %v462 = vperm.slane %v455, 5
        %v469 = vadd.f32 %v449, %v457
        %v470 = vadd.f32 %v450, %v458
        %v471 = vadd.f32 %v451, %v459
        %v472 = vadd.f32 %v452, %v460
        %v473 = vadd.f32 %v453, %v461
        %v474 = vadd.f32 %v454, %v462
        %475 = vst [vmem:[%s205] sm:$0xff] %v469
        %476 = vst [vmem:[%s205 + $0x8] sm:$0xff] %v470
        %477 = vst [vmem:[%s205 + $0x10] sm:$0xff] %v471
        %478 = vst [vmem:[%s205 + $0x18] sm:$0xff] %v472
        %479 = vst [vmem:[%s205 + $0x20] sm:$0xff] %v473
        %480 = vst [vmem:[%s205 + $0x28] sm:$0xff] %v474
        %s481 = sand.u32 %s116, 1
        %s482 = scalar_lea.sflag [#allocation4], %s481
        %s483 = sand.u32 %s116, 1
        %s484 = smul.addr %s483, 48
        %s485 = scalar_lea.vmem [#allocation5], %s484
        // Predicated region
        $region41: #{tpu_custom_call.1} parent=35 // pred_check
          %p486 = pneg %p126
        $region42: #{tpu_custom_call.1} parent=35 // pred_check_branch
          %488 = sbr.rel (%p486) target = $region44
        $region43: #{tpu_custom_call.1} parent=35 // pred_region
          %490 = vsyncadd %s482, 0
          %s491 = smul.addr %s19, 6
          %s492 = smul.addr %s491, 8
          %s493 = scalar_lea.hbm %s4, %s492
          %s495 = sshll.u32 %s485, 4
          %s496 = int_to_ptr.vmem [resolvable:$true] %s495
          %s497 = sshll.u32 %s493, 4
          %s498 = int_to_ptr.hbm [resolvable:$true] %s497
          %500 = dma.vmem_to_hbm [thread:$0]  %s496, 768, %s498, %s482
        $region44: #{tpu_custom_call.1} parent=35 // pred_fallthru
          _
      $region36: #{tpu_custom_call.1} parent=5 // pred_fallthru
        _
      %p501 = scmp.le.s32.totalorder 2, %s14
      // Predicated region
      $region45: #{tpu_custom_call.1} parent=5 // pred_check
        %p502 = pneg %p501
      $region46: #{tpu_custom_call.1} parent=5 // pred_check_branch
        %504 = sbr.rel (%p502) target = $region48
      $region47: #{tpu_custom_call.1} parent=5 // pred_region
        %s505 = ssub.s32 %s14, 2
        // Predicated region
        $region49: #{tpu_custom_call.1} parent=47 // pred_check
          %p506 = pneg %p132
        $region50: #{tpu_custom_call.1} parent=47 // pred_check_branch
          %508 = sbr.rel (%p506) target = $region52
        $region51: #{tpu_custom_call.1} parent=47 // pred_region
          %s509 = sand.u32 %s117, 1
          %s510 = scalar_lea.sflag [#allocation4], %s509
          %s511 = sand.u32 %s117, 1
          %s512 = smul.addr %s511, 48
          %s513 = scalar_lea.vmem [#allocation5], %s512
          %515 = dma.done %s510, 768
        $region52: #{tpu_custom_call.1} parent=47 // pred_fallthru
          _
      $region48: #{tpu_custom_call.1} parent=5 // pred_fallthru
        _
    $region6: #{tpu_custom_call.1} parent=1 // loop_footer
      %s18 = sadd.s32 1, %s14
    $region7: #{tpu_custom_call.1} parent=1 // loop_footer_branch
      %13 = sbr.rel target = $region3
    $region8: #{tpu_custom_call.1} parent=1 // loop_exit
      _
    %516 = vsyncpa [#allocation3], 1
    %s517 = scalar_lea.sflag [#allocation3], 1
    %518 = vsyncpa %s517, 1
    %519 = vsyncpa [#allocation4], 1
    %s520 = scalar_lea.sflag [#allocation4], 1
    %521 = vsyncpa %s520, 1

</llo_original>
